<compile_context>
chip_gen: v7x
topology: tpu7x:2x2x1
jax: 0.10.0
libtpu: 0.0.40
codegen_flags: <defaults>
</compile_context>

<pallas_src>
import functools

import jax
import jax.numpy as jnp
from jax.experimental import pallas as pl
from jax.experimental.pallas import tpu as pltpu


def _round_up(n, m):
    return ((n + m - 1) // m) * m


def _leaky_relu(v, slope=0.2):
    # Equivalent to LeakyReLU(0.2) for 0 < slope < 1; pure VPU max, no select.
    return jnp.maximum(v, slope * v)


def _vmem_capacity_bytes():
    try:
        return int(pltpu.get_tpu_info().vmem_capacity_bytes)
    except Exception:
        return 64 << 20  # conservative fallback: v7x per-TC VMEM


def _vae_kernel(
    # inputs
    x_ref, eps_ref,
    w1_ref, b1_ref, w2_ref, b2_ref,
    wml_ref, bml_ref,
    dw1_ref, db1_ref, dw2_ref, db2_ref,
    dwo_ref, dbo_ref,
    # outputs
    xhat_ref, mulv_ref,
):
    mm_dt = w1_ref.dtype          # MXU operand dtype (bf16 by default)
    Lp = eps_ref.shape[1]         # padded latent width (static)

    # ---- Encoder ----
    h = _leaky_relu(
        jnp.dot(x_ref[...].astype(mm_dt), w1_ref[...],
                preferred_element_type=jnp.float32) + b1_ref[...])
    h = _leaky_relu(
        jnp.dot(h.astype(mm_dt), w2_ref[...],
                preferred_element_type=jnp.float32) + b2_ref[...])

    # Fused mu|log_var projection -> single lane-dense [TB, 2*Lp] result.
    mulv = (jnp.dot(h.astype(mm_dt), wml_ref[...],
                    preferred_element_type=jnp.float32) + bml_ref[...])
    mu = mulv[:, :Lp]
    log_var = mulv[:, Lp:]

    # ---- Reparameterization (power == 2 -> plain Gaussian noise) ----
    std = jnp.exp(0.5 * log_var)                       # EUP
    z = mu + std * eps_ref[...].astype(jnp.float32)    # padded cols stay exact 0

    # ---- Decoder ----
    d = _leaky_relu(
        jnp.dot(z.astype(mm_dt), dw1_ref[...],
                preferred_element_type=jnp.float32) + db1_ref[...])
    d = _leaky_relu(
        jnp.dot(d.astype(mm_dt), dw2_ref[...],
                preferred_element_type=jnp.float32) + db2_ref[...])
    x_hat = (jnp.dot(d.astype(mm_dt), dwo_ref[...],
                     preferred_element_type=jnp.float32) + dbo_ref[...])

    xhat_ref[...] = x_hat.astype(xhat_ref.dtype)
    mulv_ref[...] = mulv.astype(mulv_ref.dtype)


def vae_forward(x, eps, params, *, batch_tile=1024,
                matmul_dtype=jnp.bfloat16, out_dtype=jnp.bfloat16,
                core_parallel=False):
    """Fused VAE forward. x: [B, data_dim], eps: [B, latent_dim] ~ N(0,1)."""
    B, data_dim = x.shape
    hidden_dim = params["w1"].shape[1]
    latent_dim = params["wmu"].shape[1]

    # Pad feature dims to full 128-lane tiles.  Note: 128-wide contractions
    # only fill ~25% of the v6e/v7x 256x256 MXU -- this kernel is deliberately
    # optimized for the DMA/step-overhead bound, not MXU utilization.
    Dp = _round_up(data_dim, 128)
    Hp = _round_up(hidden_dim, 128)
    Lp = _round_up(latent_dim, 128)

    f32 = jnp.float32
    is_bf16 = jnp.dtype(matmul_dtype) == jnp.dtype(jnp.bfloat16)
    # bf16 packs 16 rows per vreg sublane group -> align batch tile to 16.
    row_align = 16 if is_bf16 else 8
    eps_dtype = jnp.bfloat16 if is_bf16 else f32

    def pad2(a, rows, cols, dtype):
        out = jnp.zeros((rows, cols), dtype)
        return out.at[: a.shape[0], : a.shape[1]].set(a.astype(dtype))

    # Weights in the MXU dtype; biases stay f32 (added post-matmul in f32).
    w1 = pad2(params["w1"], Dp, Hp, matmul_dtype)
    b1 = pad2(params["b1"], 1, Hp, f32)
    w2 = pad2(params["w2"], Hp, Hp, matmul_dtype)
    b2 = pad2(params["b2"], 1, Hp, f32)
    wml = jnp.concatenate([pad2(params["wmu"], Hp, Lp, matmul_dtype),
                           pad2(params["wlv"], Hp, Lp, matmul_dtype)], axis=1)
    bml = jnp.concatenate([pad2(params["bmu"], 1, Lp, f32),
                           pad2(params["blv"], 1, Lp, f32)], axis=1)
    dw1 = pad2(params["dw1"], Lp, Hp, matmul_dtype)
    db1 = pad2(params["db1"], 1, Hp, f32)
    dw2 = pad2(params["dw2"], Hp, Hp, matmul_dtype)
    db2 = pad2(params["db2"], 1, Hp, f32)
    dwo = pad2(params["dwo"], Hp, Dp, matmul_dtype)
    dbo = pad2(params["dbo"], 1, Dp, f32)

    weight_operands = (w1, b1, w2, b2, wml, bml, dw1, db1, dw2, db2, dwo, dbo)
    weight_bytes = sum(int(w.size) * w.dtype.itemsize for w in weight_operands)

    mm_isz = jnp.dtype(matmul_dtype).itemsize
    eps_isz = jnp.dtype(eps_dtype).itemsize
    out_isz = jnp.dtype(out_dtype).itemsize

    # Capacity-aware VMEM budget: physical capacity minus ~16 MiB headroom.
    capacity = _vmem_capacity_bytes()
    vmem_budget = max(capacity - (16 << 20), 32 << 20)

    def vmem_estimate(tb):
        # Single-buffered weights + double-buffered per-step IO tiles
        # + f32 activation slack.
        io = 2 * tb * (Dp * mm_isz + Lp * eps_isz
                       + Dp * out_isz + 2 * Lp * out_isz)
        act = 6 * tb * max(Hp, Dp, 2 * Lp) * 4
        return weight_bytes + io + act + (4 << 20)

    TB = min(_round_up(batch_tile, row_align), _round_up(B, row_align))
    while TB > row_align and vmem_estimate(TB) > vmem_budget:
        TB = max(row_align, (TB // 2) // row_align * row_align)

    Bp = _round_up(B, TB)
    n_tiles = Bp // TB

    x_p = pad2(x, Bp, Dp, matmul_dtype)   # x only feeds the MXU -> bf16 DMA
    eps_p = pad2(eps, Bp, Lp, eps_dtype)  # bf16 stream, upcast in-kernel

    batch_map = lambda i: (i, 0)
    const_map = lambda i: (0, 0)   # weights resident: block index never changes

    # Constant operands single-buffered (no pointless double buffering).
    weight_spec = lambda w: pl.BlockSpec(
        w.shape, const_map, pipeline_mode=pl.Buffered(buffer_count=1))

    in_specs = [
        pl.BlockSpec((TB, Dp), batch_map),      # x tile
        pl.BlockSpec((TB, Lp), batch_map),      # eps tile
    ] + [weight_spec(w) for w in weight_operands]

    out_specs = (
        pl.BlockSpec((TB, Dp), batch_map),      # x_hat
        pl.BlockSpec((TB, 2 * Lp), batch_map),  # mu | log_var (fused)
    )

    # Advisory cost estimate for the XLA scheduler.
    flops = 2 * Bp * (Dp * Hp + Hp * Hp + Hp * 2 * Lp
                      + Lp * Hp + Hp * Hp + Hp * Dp)
    io_bytes = (Bp * Dp * mm_isz + Bp * Lp * eps_isz
                + Bp * Dp * out_isz + Bp * 2 * Lp * out_isz)
    cost = pl.CostEstimate(flops=flops, transcendentals=Bp * Lp,
                           bytes_accessed=weight_bytes + io_bytes)

    vmem_limit = int(min(max(vmem_estimate(TB), 32 << 20), vmem_budget))

    # v7x: shard independent batch tiles across the two TensorCores.
    dim_sem = (pltpu.CORE_PARALLEL,) if core_parallel else ("parallel",)

    x_hat_p, mulv_p = pl.pallas_call(
        _vae_kernel,
        grid=(n_tiles,),
        out_shape=(
            jax.ShapeDtypeStruct((Bp, Dp), out_dtype),
            jax.ShapeDtypeStruct((Bp, 2 * Lp), out_dtype),
        ),
        in_specs=in_specs,
        out_specs=out_specs,
        compiler_params=pltpu.CompilerParams(
            dimension_semantics=dim_sem,
            vmem_limit_bytes=vmem_limit,
        ),
        cost_estimate=cost,
    )(x_p, eps_p, *weight_operands)

    x_hat = x_hat_p[:B, :data_dim]
    mu = mulv_p[:B, :latent_dim]
    log_var = mulv_p[:B, Lp:Lp + latent_dim]
    return x_hat, mu, log_var


def init_params(key, data_dim, hidden_dim, latent_dim):
    """Deterministic synthetic parameter init (weights stored as (in, out))."""
    keys = jax.random.split(key, 7)

    def lin(k, fan_in, fan_out):
        # PyTorch-like uniform(-1/sqrt(fan_in), 1/sqrt(fan_in))
        bound = 1.0 / jnp.sqrt(jnp.float32(fan_in))
        kw, kb = jax.random.split(k)
        w = jax.random.uniform(kw, (fan_in, fan_out), jnp.float32, -bound, bound)
        b = jax.random.uniform(kb, (1, fan_out), jnp.float32, -bound, bound)
        return w, b

    w1, b1 = lin(keys[0], data_dim, hidden_dim)
    w2, b2 = lin(keys[1], hidden_dim, hidden_dim)
    wmu, bmu = lin(keys[2], hidden_dim, latent_dim)
    wlv, blv = lin(keys[3], hidden_dim, latent_dim)
    dw1, db1 = lin(keys[4], latent_dim, hidden_dim)
    dw2, db2 = lin(keys[5], hidden_dim, hidden_dim)
    dwo, dbo = lin(keys[6], hidden_dim, data_dim)

    return dict(
        w1=w1, b1=b1, w2=w2, b2=b2,
        wmu=wmu, bmu=bmu, wlv=wlv, blv=blv,
        dw1=dw1, db1=db1, dw2=dw2, db2=db2,
        dwo=dwo, dbo=dbo,
    )


def _reference_forward(x, eps, p, matmul_dtype=jnp.bfloat16,
                       out_dtype=jnp.bfloat16):
    """Pure-JAX reference mirroring the kernel's bf16-operand / f32-accumulate
    matmuls, bf16 eps stream, and bf16 output cast."""
    mm = lambda a, w: jnp.dot(a.astype(matmul_dtype), w.astype(matmul_dtype),
                              preferred_element_type=jnp.float32)
    lrelu = lambda v: jnp.maximum(v, 0.2 * v)
    eps_q = eps.astype(matmul_dtype).astype(jnp.float32)
    h = lrelu(mm(x, p["w1"]) + p["b1"])
    h = lrelu(mm(h, p["w2"]) + p["b2"])
    mu = mm(h, p["wmu"]) + p["bmu"]
    log_var = mm(h, p["wlv"]) + p["blv"]
    z = mu + jnp.exp(0.5 * log_var) * eps_q
    d = lrelu(mm(z, p["dw1"]) + p["db1"])
    d = lrelu(mm(d, p["dw2"]) + p["db2"])
    x_hat = mm(d, p["dwo"]) + p["dbo"]
    return (x_hat.astype(out_dtype), mu.astype(out_dtype),
            log_var.astype(out_dtype))


if __name__ == "__main__":
    # Small shapes consistent with the module: x is [batch, data_dim].
    batch, data_dim, hidden_dim, latent_dim = 2, 16, 32, 8

    key = jax.random.PRNGKey(0)
    k_params, k_x, k_eps, k_x2, k_eps2 = jax.random.split(key, 5)

    params = init_params(k_params, data_dim, hidden_dim, latent_dim)
    x = jax.random.normal(k_x, (batch, data_dim), jnp.float32)
    # eps ~ N(0, 1), matching torch.randn_like(std) (power == 2 -> no rescale).
    eps = jax.random.normal(k_eps, (batch, latent_dim), jnp.float32)

    f32 = lambda a: jnp.asarray(a, jnp.float32)
    tol = dict(atol=2e-2, rtol=2e-2)   # bf16 output rounding + MXU accumulation

    fwd = jax.jit(vae_forward)
    x_hat, mu, log_var = jax.block_until_ready(fwd(x, eps, params))

    ref_xhat, ref_mu, ref_lv = _reference_forward(x, eps, params)
    assert x_hat.shape == (batch, data_dim)
    assert mu.shape == (batch, latent_dim)
    assert log_var.shape == (batch, latent_dim)
    assert jnp.allclose(f32(x_hat), f32(ref_xhat), **tol)
    assert jnp.allclose(f32(mu), f32(ref_mu), **tol)
    assert jnp.allclose(f32(log_var), f32(ref_lv), **tol)

    # Second check: non-trivial grid (batch 20, tile rounded up to 16 -> 2 tiles).
    b2 = 20
    x2 = jax.random.normal(k_x2, (b2, data_dim), jnp.float32)
    eps2 = jax.random.normal(k_eps2, (b2, latent_dim), jnp.float32)
    xh2, mu2, lv2 = jax.block_until_ready(
        vae_forward(x2, eps2, params, batch_tile=8))
    r_xh2, r_mu2, r_lv2 = _reference_forward(x2, eps2, params)
    assert xh2.shape == (b2, data_dim)
    assert jnp.allclose(f32(xh2), f32(r_xh2), **tol)
    assert jnp.allclose(f32(mu2), f32(r_mu2), **tol)
    assert jnp.allclose(f32(lv2), f32(r_lv2), **tol)

    print("KERNEL_OK")
</pallas_src>

<mosaic_0001>
module attributes {stable_mosaic.version = 11 : i64} {
  func.func @_vae_kernel(%arg0: i32, %arg1: memref<16x128xbf16, #tpu.memory_space<vmem>>, %arg2: memref<16x128xbf16, #tpu.memory_space<vmem>>, %arg3: memref<128x128xbf16, #tpu.memory_space<vmem>>, %arg4: memref<1x128xf32, #tpu.memory_space<vmem>>, %arg5: memref<128x128xbf16, #tpu.memory_space<vmem>>, %arg6: memref<1x128xf32, #tpu.memory_space<vmem>>, %arg7: memref<128x256xbf16, #tpu.memory_space<vmem>>, %arg8: memref<1x256xf32, #tpu.memory_space<vmem>>, %arg9: memref<128x128xbf16, #tpu.memory_space<vmem>>, %arg10: memref<1x128xf32, #tpu.memory_space<vmem>>, %arg11: memref<128x128xbf16, #tpu.memory_space<vmem>>, %arg12: memref<1x128xf32, #tpu.memory_space<vmem>>, %arg13: memref<128x128xbf16, #tpu.memory_space<vmem>>, %arg14: memref<1x128xf32, #tpu.memory_space<vmem>>, %arg15: memref<16x128xbf16, #tpu.memory_space<vmem>>, %arg16: memref<16x256xbf16, #tpu.memory_space<vmem>>) attributes {dimension_semantics = [#tpu.dimension_semantics<parallel>], iteration_bounds = array<i64: 1>, scalar_prefetch = 0 : i64, scratch_operands = 0 : i64, tpu.core_type = #tpu.core_type<tc>, window_params = [{transform_indices = @transform_0, window_bounds = array<i64: 16, 128>}, {transform_indices = @transform_1, window_bounds = array<i64: 16, 128>}, {pipeline_mode = #tpu.pipeline_mode<synchronous>, transform_indices = @transform_2, window_bounds = array<i64: 128, 128>}, {pipeline_mode = #tpu.pipeline_mode<synchronous>, transform_indices = @transform_3, window_bounds = array<i64: 1, 128>}, {pipeline_mode = #tpu.pipeline_mode<synchronous>, transform_indices = @transform_4, window_bounds = array<i64: 128, 128>}, {pipeline_mode = #tpu.pipeline_mode<synchronous>, transform_indices = @transform_5, window_bounds = array<i64: 1, 128>}, {pipeline_mode = #tpu.pipeline_mode<synchronous>, transform_indices = @transform_6, window_bounds = array<i64: 128, 256>}, {pipeline_mode = #tpu.pipeline_mode<synchronous>, transform_indices = @transform_7, window_bounds = array<i64: 1, 256>}, {pipeline_mode = #tpu.pipeline_mode<synchronous>, transform_indices = @transform_8, window_bounds = array<i64: 128, 128>}, {pipeline_mode = #tpu.pipeline_mode<synchronous>, transform_indices = @transform_9, window_bounds = array<i64: 1, 128>}, {pipeline_mode = #tpu.pipeline_mode<synchronous>, transform_indices = @transform_10, window_bounds = array<i64: 128, 128>}, {pipeline_mode = #tpu.pipeline_mode<synchronous>, transform_indices = @transform_11, window_bounds = array<i64: 1, 128>}, {pipeline_mode = #tpu.pipeline_mode<synchronous>, transform_indices = @transform_12, window_bounds = array<i64: 128, 128>}, {pipeline_mode = #tpu.pipeline_mode<synchronous>, transform_indices = @transform_13, window_bounds = array<i64: 1, 128>}, {transform_indices = @transform_14, window_bounds = array<i64: 16, 128>}, {transform_indices = @transform_15, window_bounds = array<i64: 16, 256>}]} {
    %c0 = arith.constant 0 : index
    %c0_0 = arith.constant 0 : index
    %0 = vector.load %arg1[%c0, %c0_0] : memref<16x128xbf16, #tpu.memory_space<vmem>>, vector<16x128xbf16>
    %c0_1 = arith.constant 0 : index
    %c0_2 = arith.constant 0 : index
    %1 = vector.load %arg3[%c0_1, %c0_2] : memref<128x128xbf16, #tpu.memory_space<vmem>>, vector<128x128xbf16>
    %cst = arith.constant dense<0.000000e+00> : vector<16x128xf32>
    %2 = tpu.matmul %0, %1, %cst {dimension_numbers = #tpu.dot_dimension_numbers<[1], [0], [0], [1], [0, 0, 1, 1], [], []>} : vector<16x128xbf16>, vector<128x128xbf16>, vector<16x128xf32> -> vector<16x128xf32>
    %c0_3 = arith.constant 0 : index
    %c0_4 = arith.constant 0 : index
    %3 = vector.load %arg4[%c0_3, %c0_4] : memref<1x128xf32, #tpu.memory_space<vmem>>, vector<1x128xf32>
    %4 = vector.broadcast %3 : vector<1x128xf32> to vector<16x128xf32>
    %5 = arith.addf %2, %4 : vector<16x128xf32>
    %cst_5 = arith.constant 2.000000e-01 : f32
    %6 = vector.broadcast %cst_5 : f32 to vector<16x128xf32>
    %7 = arith.mulf %6, %5 : vector<16x128xf32>
    %8 = arith.maximumf %5, %7 : vector<16x128xf32>
    %9 = arith.truncf %8 : vector<16x128xf32> to vector<16x128xbf16>
    %c0_6 = arith.constant 0 : index
    %c0_7 = arith.constant 0 : index
    %10 = vector.load %arg5[%c0_6, %c0_7] : memref<128x128xbf16, #tpu.memory_space<vmem>>, vector<128x128xbf16>
    %cst_8 = arith.constant dense<0.000000e+00> : vector<16x128xf32>
    %11 = tpu.matmul %9, %10, %cst_8 {dimension_numbers = #tpu.dot_dimension_numbers<[1], [0], [0], [1], [0, 0, 1, 1], [], []>} : vector<16x128xbf16>, vector<128x128xbf16>, vector<16x128xf32> -> vector<16x128xf32>
    %c0_9 = arith.constant 0 : index
    %c0_10 = arith.constant 0 : index
    %12 = vector.load %arg6[%c0_9, %c0_10] : memref<1x128xf32, #tpu.memory_space<vmem>>, vector<1x128xf32>
    %13 = vector.broadcast %12 : vector<1x128xf32> to vector<16x128xf32>
    %14 = arith.addf %11, %13 : vector<16x128xf32>
    %cst_11 = arith.constant 2.000000e-01 : f32
    %15 = vector.broadcast %cst_11 : f32 to vector<16x128xf32>
    %16 = arith.mulf %15, %14 : vector<16x128xf32>
    %17 = arith.maximumf %14, %16 : vector<16x128xf32>
    %18 = arith.truncf %17 : vector<16x128xf32> to vector<16x128xbf16>
    %c0_12 = arith.constant 0 : index
    %c0_13 = arith.constant 0 : index
    %19 = vector.load %arg7[%c0_12, %c0_13] : memref<128x256xbf16, #tpu.memory_space<vmem>>, vector<128x256xbf16>
    %cst_14 = arith.constant dense<0.000000e+00> : vector<16x256xf32>
    %20 = tpu.matmul %18, %19, %cst_14 {dimension_numbers = #tpu.dot_dimension_numbers<[1], [0], [0], [1], [0, 0, 1, 1], [], []>} : vector<16x128xbf16>, vector<128x256xbf16>, vector<16x256xf32> -> vector<16x256xf32>
    %c0_15 = arith.constant 0 : index
    %c0_16 = arith.constant 0 : index
    %21 = vector.load %arg8[%c0_15, %c0_16] : memref<1x256xf32, #tpu.memory_space<vmem>>, vector<1x256xf32>
    %22 = vector.broadcast %21 : vector<1x256xf32> to vector<16x256xf32>
    %23 = arith.addf %20, %22 : vector<16x256xf32>
    %24 = vector.extract_strided_slice %23 {offsets = [0, 0], sizes = [16, 128], strides = [1, 1]} : vector<16x256xf32> to vector<16x128xf32>
    %25 = vector.extract_strided_slice %23 {offsets = [0, 128], sizes = [16, 128], strides = [1, 1]} : vector<16x256xf32> to vector<16x128xf32>
    %cst_17 = arith.constant 5.000000e-01 : f32
    %26 = vector.broadcast %cst_17 : f32 to vector<16x128xf32>
    %27 = arith.mulf %26, %25 : vector<16x128xf32>
    %28 = math.exp %27 : vector<16x128xf32>
    %c0_18 = arith.constant 0 : index
    %c0_19 = arith.constant 0 : index
    %29 = vector.load %arg2[%c0_18, %c0_19] : memref<16x128xbf16, #tpu.memory_space<vmem>>, vector<16x128xbf16>
    %30 = arith.extf %29 : vector<16x128xbf16> to vector<16x128xf32>
    %31 = arith.mulf %28, %30 : vector<16x128xf32>
    %32 = arith.addf %24, %31 : vector<16x128xf32>
    %33 = arith.truncf %32 : vector<16x128xf32> to vector<16x128xbf16>
    %c0_20 = arith.constant 0 : index
    %c0_21 = arith.constant 0 : index
    %34 = vector.load %arg9[%c0_20, %c0_21] : memref<128x128xbf16, #tpu.memory_space<vmem>>, vector<128x128xbf16>
    %cst_22 = arith.constant dense<0.000000e+00> : vector<16x128xf32>
    %35 = tpu.matmul %33, %34, %cst_22 {dimension_numbers = #tpu.dot_dimension_numbers<[1], [0], [0], [1], [0, 0, 1, 1], [], []>} : vector<16x128xbf16>, vector<128x128xbf16>, vector<16x128xf32> -> vector<16x128xf32>
    %c0_23 = arith.constant 0 : index
    %c0_24 = arith.constant 0 : index
    %36 = vector.load %arg10[%c0_23, %c0_24] : memref<1x128xf32, #tpu.memory_space<vmem>>, vector<1x128xf32>
    %37 = vector.broadcast %36 : vector<1x128xf32> to vector<16x128xf32>
    %38 = arith.addf %35, %37 : vector<16x128xf32>
    %cst_25 = arith.constant 2.000000e-01 : f32
    %39 = vector.broadcast %cst_25 : f32 to vector<16x128xf32>
    %40 = arith.mulf %39, %38 : vector<16x128xf32>
    %41 = arith.maximumf %38, %40 : vector<16x128xf32>
    %42 = arith.truncf %41 : vector<16x128xf32> to vector<16x128xbf16>
    %c0_26 = arith.constant 0 : index
    %c0_27 = arith.constant 0 : index
    %43 = vector.load %arg11[%c0_26, %c0_27] : memref<128x128xbf16, #tpu.memory_space<vmem>>, vector<128x128xbf16>
    %cst_28 = arith.constant dense<0.000000e+00> : vector<16x128xf32>
    %44 = tpu.matmul %42, %43, %cst_28 {dimension_numbers = #tpu.dot_dimension_numbers<[1], [0], [0], [1], [0, 0, 1, 1], [], []>} : vector<16x128xbf16>, vector<128x128xbf16>, vector<16x128xf32> -> vector<16x128xf32>
    %c0_29 = arith.constant 0 : index
    %c0_30 = arith.constant 0 : index
    %45 = vector.load %arg12[%c0_29, %c0_30] : memref<1x128xf32, #tpu.memory_space<vmem>>, vector<1x128xf32>
    %46 = vector.broadcast %45 : vector<1x128xf32> to vector<16x128xf32>
    %47 = arith.addf %44, %46 : vector<16x128xf32>
    %cst_31 = arith.constant 2.000000e-01 : f32
    %48 = vector.broadcast %cst_31 : f32 to vector<16x128xf32>
    %49 = arith.mulf %48, %47 : vector<16x128xf32>
    %50 = arith.maximumf %47, %49 : vector<16x128xf32>
    %51 = arith.truncf %50 : vector<16x128xf32> to vector<16x128xbf16>
    %c0_32 = arith.constant 0 : index
    %c0_33 = arith.constant 0 : index
    %52 = vector.load %arg13[%c0_32, %c0_33] : memref<128x128xbf16, #tpu.memory_space<vmem>>, vector<128x128xbf16>
    %cst_34 = arith.constant dense<0.000000e+00> : vector<16x128xf32>
    %53 = tpu.matmul %51, %52, %cst_34 {dimension_numbers = #tpu.dot_dimension_numbers<[1], [0], [0], [1], [0, 0, 1, 1], [], []>} : vector<16x128xbf16>, vector<128x128xbf16>, vector<16x128xf32> -> vector<16x128xf32>
    %c0_35 = arith.constant 0 : index
    %c0_36 = arith.constant 0 : index
    %54 = vector.load %arg14[%c0_35, %c0_36] : memref<1x128xf32, #tpu.memory_space<vmem>>, vector<1x128xf32>
    %55 = vector.broadcast %54 : vector<1x128xf32> to vector<16x128xf32>
    %56 = arith.addf %53, %55 : vector<16x128xf32>
    %57 = arith.truncf %56 : vector<16x128xf32> to vector<16x128xbf16>
    %c0_37 = arith.constant 0 : index
    %c0_38 = arith.constant 0 : index
    %58 = vector.load %arg15[%c0_37, %c0_38] : memref<16x128xbf16, #tpu.memory_space<vmem>>, vector<16x128xbf16>
    tpu.vector_store %arg15[%c0_37, %c0_38], %57 {strides = array<i32>} : memref<16x128xbf16, #tpu.memory_space<vmem>>, vector<16x128xbf16>,
    %59 = arith.truncf %23 : vector<16x256xf32> to vector<16x256xbf16>
    %c0_39 = arith.constant 0 : index
    %c0_40 = arith.constant 0 : index
    %60 = vector.load %arg16[%c0_39, %c0_40] : memref<16x256xbf16, #tpu.memory_space<vmem>>, vector<16x256xbf16>
    tpu.vector_store %arg16[%c0_39, %c0_40], %59 {strides = array<i32>} : memref<16x256xbf16, #tpu.memory_space<vmem>>, vector<16x256xbf16>,
    return
  }
  func.func @transform_0(%arg0: i32) -> (i32, i32) {
    %c0_i32 = arith.constant 0 : i32
    %c0_i32_0 = arith.constant 0 : i32
    return %arg0, %c0_i32 : i32, i32
  }
  func.func @transform_1(%arg0: i32) -> (i32, i32) {
    %c0_i32 = arith.constant 0 : i32
    %c0_i32_0 = arith.constant 0 : i32
    return %arg0, %c0_i32 : i32, i32
  }
  func.func @transform_2(%arg0: i32) -> (i32, i32) {
    %c0_i32 = arith.constant 0 : i32
    %c0_i32_0 = arith.constant 0 : i32
    %c0_i32_1 = arith.constant 0 : i32
    return %c0_i32, %c0_i32_0 : i32, i32
  }
  func.func @transform_3(%arg0: i32) -> (i32, i32) {
    %c0_i32 = arith.constant 0 : i32
    %c0_i32_0 = arith.constant 0 : i32
    %c0_i32_1 = arith.constant 0 : i32
    return %c0_i32, %c0_i32_0 : i32, i32
  }
  func.func @transform_4(%arg0: i32) -> (i32, i32) {
    %c0_i32 = arith.constant 0 : i32
    %c0_i32_0 = arith.constant 0 : i32
    %c0_i32_1 = arith.constant 0 : i32
    return %c0_i32, %c0_i32_0 : i32, i32
  }
  func.func @transform_5(%arg0: i32) -> (i32, i32) {
    %c0_i32 = arith.constant 0 : i32
    %c0_i32_0 = arith.constant 0 : i32
    %c0_i32_1 = arith.constant 0 : i32
    return %c0_i32, %c0_i32_0 : i32, i32
  }
  func.func @transform_6(%arg0: i32) -> (i32, i32) {
    %c0_i32 = arith.constant 0 : i32
    %c0_i32_0 = arith.constant 0 : i32
    %c0_i32_1 = arith.constant 0 : i32
    return %c0_i32, %c0_i32_0 : i32, i32
  }
  func.func @transform_7(%arg0: i32) -> (i32, i32) {
    %c0_i32 = arith.constant 0 : i32
    %c0_i32_0 = arith.constant 0 : i32
    %c0_i32_1 = arith.constant 0 : i32
    return %c0_i32, %c0_i32_0 : i32, i32
  }
  func.func @transform_8(%arg0: i32) -> (i32, i32) {
    %c0_i32 = arith.constant 0 : i32
    %c0_i32_0 = arith.constant 0 : i32
    %c0_i32_1 = arith.constant 0 : i32
    return %c0_i32, %c0_i32_0 : i32, i32
  }
  func.func @transform_9(%arg0: i32) -> (i32, i32) {
    %c0_i32 = arith.constant 0 : i32
    %c0_i32_0 = arith.constant 0 : i32
    %c0_i32_1 = arith.constant 0 : i32
    return %c0_i32, %c0_i32_0 : i32, i32
  }
  func.func @transform_10(%arg0: i32) -> (i32, i32) {
    %c0_i32 = arith.constant 0 : i32
    %c0_i32_0 = arith.constant 0 : i32
    %c0_i32_1 = arith.constant 0 : i32
    return %c0_i32, %c0_i32_0 : i32, i32
  }
  func.func @transform_11(%arg0: i32) -> (i32, i32) {
    %c0_i32 = arith.constant 0 : i32
    %c0_i32_0 = arith.constant 0 : i32
    %c0_i32_1 = arith.constant 0 : i32
    return %c0_i32, %c0_i32_0 : i32, i32
  }
  func.func @transform_12(%arg0: i32) -> (i32, i32) {
    %c0_i32 = arith.constant 0 : i32
    %c0_i32_0 = arith.constant 0 : i32
    %c0_i32_1 = arith.constant 0 : i32
    return %c0_i32, %c0_i32_0 : i32, i32
  }
  func.func @transform_13(%arg0: i32) -> (i32, i32) {
    %c0_i32 = arith.constant 0 : i32
    %c0_i32_0 = arith.constant 0 : i32
    %c0_i32_1 = arith.constant 0 : i32
    return %c0_i32, %c0_i32_0 : i32, i32
  }
  func.func @transform_14(%arg0: i32) -> (i32, i32) {
    %c0_i32 = arith.constant 0 : i32
    %c0_i32_0 = arith.constant 0 : i32
    return %arg0, %c0_i32 : i32, i32
  }
  func.func @transform_15(%arg0: i32) -> (i32, i32) {
    %c0_i32 = arith.constant 0 : i32
    %c0_i32_0 = arith.constant 0 : i32
    return %arg0, %c0_i32 : i32, i32
  }
}

</mosaic_0001>

<llo_original>
// kernel: vae_forward.1
$region0: #{vae_forward.1}
  #allocation0 [shape = 'u32[]', space=smem, size = 0x4, offset = 0x4, fixed_abs, tag = 'smem constant byte address 0x4 - core index']
  #allocation1 [shape = 'u32[144,128]{1,0:T(1,128)}', space=vmem, size = 0x12000, scoped, tag = 'internal scratch']
  %s0 = inlined_call_operand.vmem [shape: bf16[16,128], index: 0, kind: input, shape index: {}]
  %s1 = inlined_call_operand.vmem [shape: bf16[16,128], index: 1, kind: input, shape index: {}]
  %s2 = inlined_call_operand.vmem [shape: bf16[128,128], index: 2, kind: input, shape index: {}]
  %s3 = inlined_call_operand.vmem [shape: f32[1,128], index: 3, kind: input, shape index: {}]
  %s4 = inlined_call_operand.vmem [shape: bf16[128,128], index: 4, kind: input, shape index: {}]
  %s5 = inlined_call_operand.vmem [shape: f32[1,128], index: 5, kind: input, shape index: {}]
  %s6 = inlined_call_operand.vmem [shape: bf16[128,256], index: 6, kind: input, shape index: {}]
  %s7 = inlined_call_operand.vmem [shape: f32[1,256], index: 7, kind: input, shape index: {}]
  %s8 = inlined_call_operand.vmem [shape: bf16[128,128], index: 8, kind: input, shape index: {}]
  %s9 = inlined_call_operand.vmem [shape: f32[1,128], index: 9, kind: input, shape index: {}]
  %s10 = inlined_call_operand.vmem [shape: bf16[128,128], index: 10, kind: input, shape index: {}]
  %s11 = inlined_call_operand.vmem [shape: f32[1,128], index: 11, kind: input, shape index: {}]
  %s12 = inlined_call_operand.vmem [shape: bf16[128,128], index: 12, kind: input, shape index: {}]
  %s13 = inlined_call_operand.vmem [shape: f32[1,128], index: 13, kind: input, shape index: {}]
  %s14 = inlined_call_operand.vmem [shape: bf16[16,128], index: 14, kind: output, shape index: {0}]
  %s15 = inlined_call_operand.vmem [shape: bf16[16,256], index: 15, kind: output, shape index: {1}]
  %16 = xla_tuple %s14, %s15
  %s17 = sld [smem:[#allocation0]]
  $region74: #{vae_forward.1} parent=0
    _
  %s19 = ssub.s32 1, %s17
  %s20 = scalar_select 0, %s19, %s17
  // Predicated region
  $region2: #{vae_forward.1} parent=0 // pred_check
    _
  $region3: #{vae_forward.1} parent=0 // pred_check_branch
    %22 = sbr.rel (0) target = $region5
  $region4: #{vae_forward.1} parent=0 // pred_region
    _
  $region5: #{vae_forward.1} parent=0 // pred_fallthru
    _
  // Predicated region
  $region6: #{vae_forward.1} parent=0 // pred_check
    _
  $region7: #{vae_forward.1} parent=0 // pred_check_branch
    %24 = sbr.rel (0) target = $region9
  $region8: #{vae_forward.1} parent=0 // pred_region
    _
  $region9: #{vae_forward.1} parent=0 // pred_fallthru
    _
  // Predicated region
  $region10: #{vae_forward.1} parent=0 // pred_check
    _
  $region11: #{vae_forward.1} parent=0 // pred_check_branch
    %26 = sbr.rel (0) target = $region13
  $region12: #{vae_forward.1} parent=0 // pred_region
    _
  $region13: #{vae_forward.1} parent=0 // pred_fallthru
    _
  // Predicated region
  $region14: #{vae_forward.1} parent=0 // pred_check
    _
  $region15: #{vae_forward.1} parent=0 // pred_check_branch
    %28 = sbr.rel (0) target = $region17
  $region16: #{vae_forward.1} parent=0 // pred_region
    _
  $region17: #{vae_forward.1} parent=0 // pred_fallthru
    _
  // Predicated region
  $region18: #{vae_forward.1} parent=0 // pred_check
    _
  $region19: #{vae_forward.1} parent=0 // pred_check_branch
    %30 = sbr.rel (0) target = $region21
  $region20: #{vae_forward.1} parent=0 // pred_region
    _
  $region21: #{vae_forward.1} parent=0 // pred_fallthru
    _
  // Predicated region
  $region22: #{vae_forward.1} parent=0 // pred_check
    _
  $region23: #{vae_forward.1} parent=0 // pred_check_branch
    %32 = sbr.rel (0) target = $region25
  $region24: #{vae_forward.1} parent=0 // pred_region
    _
  $region25: #{vae_forward.1} parent=0 // pred_fallthru
    _
  // Predicated region
  $region26: #{vae_forward.1} parent=0 // pred_check
    _
  $region27: #{vae_forward.1} parent=0 // pred_check_branch
    %34 = sbr.rel (0) target = $region29
  $region28: #{vae_forward.1} parent=0 // pred_region
    _
  $region29: #{vae_forward.1} parent=0 // pred_fallthru
    _
  // Predicated region
  $region30: #{vae_forward.1} parent=0 // pred_check
    _
  $region31: #{vae_forward.1} parent=0 // pred_check_branch
    %36 = sbr.rel (0) target = $region33
  $region32: #{vae_forward.1} parent=0 // pred_region
    _
  $region33: #{vae_forward.1} parent=0 // pred_fallthru
    _
  // Predicated region
  $region34: #{vae_forward.1} parent=0 // pred_check
    _
  $region35: #{vae_forward.1} parent=0 // pred_check_branch
    %38 = sbr.rel (0) target = $region37
  $region36: #{vae_forward.1} parent=0 // pred_region
    _
  $region37: #{vae_forward.1} parent=0 // pred_fallthru
    _
  // Predicated region
  $region38: #{vae_forward.1} parent=0 // pred_check
    _
  $region39: #{vae_forward.1} parent=0 // pred_check_branch
    %40 = sbr.rel (0) target = $region41
  $region40: #{vae_forward.1} parent=0 // pred_region
    _
  $region41: #{vae_forward.1} parent=0 // pred_fallthru
    _
  // Predicated region
  $region42: #{vae_forward.1} parent=0 // pred_check
    _
  $region43: #{vae_forward.1} parent=0 // pred_check_branch
    %42 = sbr.rel (0) target = $region45
  $region44: #{vae_forward.1} parent=0 // pred_region
    _
  $region45: #{vae_forward.1} parent=0 // pred_fallthru
    _
  // Predicated region
  $region46: #{vae_forward.1} parent=0 // pred_check
    _
  $region47: #{vae_forward.1} parent=0 // pred_check_branch
    %44 = sbr.rel (0) target = $region49
  $region48: #{vae_forward.1} parent=0 // pred_region
    _
  $region49: #{vae_forward.1} parent=0 // pred_fallthru
    _
  // Predicated region
  $region50: #{vae_forward.1} parent=0 // pred_check
    _
  $region51: #{vae_forward.1} parent=0 // pred_check_branch
    %46 = sbr.rel (0) target = $region53
  $region52: #{vae_forward.1} parent=0 // pred_region
    _
  $region53: #{vae_forward.1} parent=0 // pred_fallthru
    _
  // Predicated region
  $region54: #{vae_forward.1} parent=0 // pred_check
    _
  $region55: #{vae_forward.1} parent=0 // pred_check_branch
    %48 = sbr.rel (0) target = $region57
  $region56: #{vae_forward.1} parent=0 // pred_region
    _
  $region57: #{vae_forward.1} parent=0 // pred_fallthru
    _
  %v50 = vld [vmem:[%s0] sm:$0xf]
  %v51 = vld [vmem:[%s0 + $0x4] sm:$0xf]
  %v52 = vld [vmem:[%s2] sm:$0xf]
  %v53 = vld [vmem:[%s2 + $0x4] sm:$0xf]
  %v54 = vld [vmem:[%s2 + $0x8] sm:$0xf]
  %v55 = vld [vmem:[%s2 + $0xc] sm:$0xf]
  %v56 = vld [vmem:[%s2 + $0x10] sm:$0xf]
  %v57 = vld [vmem:[%s2 + $0x14] sm:$0xf]
  %v58 = vld [vmem:[%s2 + $0x18] sm:$0xf]
  %v59 = vld [vmem:[%s2 + $0x1c] sm:$0xf]
  %v60 = vld [vmem:[%s2 + $0x20] sm:$0xf]
  %v61 = vld [vmem:[%s2 + $0x24] sm:$0xf]
  %v62 = vld [vmem:[%s2 + $0x28] sm:$0xf]
  %v63 = vld [vmem:[%s2 + $0x2c] sm:$0xf]
  %v64 = vld [vmem:[%s2 + $0x30] sm:$0xf]
  %v65 = vld [vmem:[%s2 + $0x34] sm:$0xf]
  %v66 = vld [vmem:[%s2 + $0x38] sm:$0xf]
  %v67 = vld [vmem:[%s2 + $0x3c] sm:$0xf]
  %v68 = vld [vmem:[%s3] sm:$0x1]
  %v70 = vlaneseq
  %v71 = vshrl.u32 %v70, 7
  %v72 = vsub.s32 0, %v71
  %v73 = vrot.slane %v68, %v72
  %v77 = vunpack.c.l.b16 %v50
  %v78 = vunpack.c.l.b16 %v51
  %v79 = vpack.c.b16 %v78, %v77
  %v97 = vunpack.c.l.b16 %v52
  %v98 = vunpack.c.l.b16 %v53
  %v99 = vunpack.c.l.b16 %v54
  %v100 = vunpack.c.l.b16 %v55
  %v101 = vunpack.c.l.b16 %v56
  %v102 = vunpack.c.l.b16 %v57
  %v103 = vunpack.c.l.b16 %v58
  %v104 = vunpack.c.l.b16 %v59
  %v105 = vunpack.c.l.b16 %v60
  %v106 = vunpack.c.l.b16 %v61
  %v107 = vunpack.c.l.b16 %v62
  %v108 = vunpack.c.l.b16 %v63
  %v109 = vunpack.c.l.b16 %v64
  %v110 = vunpack.c.l.b16 %v65
  %v111 = vunpack.c.l.b16 %v66
  %v112 = vunpack.c.l.b16 %v67
  %v113 = vpack.c.b16 %v98, %v97
  %v114 = vpack.c.b16 %v100, %v99
  %v115 = vpack.c.b16 %v102, %v101
  %v116 = vpack.c.b16 %v104, %v103
  %v117 = vpack.c.b16 %v106, %v105
  %v118 = vpack.c.b16 %v108, %v107
  %v119 = vpack.c.b16 %v110, %v109
  %v120 = vpack.c.b16 %v112, %v111
  %129 = vmatprep.subr.bf16.mxu0 0
  %130 = vmatpush1.bf16.msra.mxu0 %v113
  %131 = vmatprep.subr.bf16.mxu0 0
  %132 = vmatpush1.bf16.msra.mxu0 %v114
  %133 = vmatprep.subr.bf16.mxu0 0
  %134 = vmatpush1.bf16.msra.mxu0 %v115
  %135 = vmatprep.subr.bf16.mxu0 0
  %136 = vmatpush1.bf16.msra.mxu0 %v116
  %137 = vmatprep.subr.bf16.mxu0 0
  %138 = vmatpush1.bf16.msra.mxu0 %v117
  %139 = vmatprep.subr.bf16.mxu0 0
  %140 = vmatpush1.bf16.msra.mxu0 %v118
  %141 = vmatprep.subr.bf16.mxu0 0
  %142 = vmatpush1.bf16.msra.mxu0 %v119
  %143 = vmatprep.subr.bf16.mxu0 0
  %144 = vmatpush1.bf16.msra.mxu0 %v120
  %145 = vmatprep.subr.bf16.mxu0 0
  %146 = vmatpush1.bf16.msra.mxu0 0
  %147 = vmatprep.subr.bf16.mxu0 0
  %148 = vmatpush1.bf16.msra.mxu0 0
  %149 = vmatprep.subr.bf16.mxu0 0
  %150 = vmatpush1.bf16.msra.mxu0 0
  %151 = vmatprep.subr.bf16.mxu0 0
  %152 = vmatpush1.bf16.msra.mxu0 0
  %153 = vmatprep.subr.bf16.mxu0 0
  %154 = vmatpush1.bf16.msra.mxu0 0
  %155 = vmatprep.subr.bf16.mxu0 0
  %156 = vmatpush1.bf16.msra.mxu0 0
  %157 = vmatprep.subr.bf16.mxu0 0
  %158 = vmatpush1.bf16.msra.mxu0 0
  %159 = vmatprep.subr.bf16.mxu0 0
  %160 = vmatpush1.bf16.msra.mxu0 0
  %161 = vmatprep.mubr.bf16.mxu0 0
  %162 = vmatmul.mubr.bf16.gmra.mrb[0].mxu0 %v79
  %v163 = vpop.f32.mrb[0].mxu0
  %v164 = vadd.f32 %v73, %v163
  %v165 = vpop.f32.mrb[0].mxu0
  %v166 = vpop.f32.mrb[0].mxu0
  %v167 = vadd.f32 %v73, %v166
  %v168 = vpop.f32.mrb[0].mxu0
  %169 = vdwg.mxu0
  %v170 = vmul.f32 %v164, 0.2
  %v171 = vmul.f32 %v167, 0.2
  %v172 = vmax.f32 %v164, %v170
  %v173 = vmax.f32 %v167, %v171
  %v174 = vpack.c.bf16 %v173, %v172
  %v175 = vld [vmem:[%s4] sm:$0xf]
  %v176 = vld [vmem:[%s4 + $0x4] sm:$0xf]
  %v177 = vld [vmem:[%s4 + $0x8] sm:$0xf]
  %v178 = vld [vmem:[%s4 + $0xc] sm:$0xf]
  %v179 = vld [vmem:[%s4 + $0x10] sm:$0xf]
  %v180 = vld [vmem:[%s4 + $0x14] sm:$0xf]
  %v181 = vld [vmem:[%s4 + $0x18] sm:$0xf]
  %v182 = vld [vmem:[%s4 + $0x1c] sm:$0xf]
  %v183 = vld [vmem:[%s4 + $0x20] sm:$0xf]
  %v184 = vld [vmem:[%s4 + $0x24] sm:$0xf]
  %v185 = vld [vmem:[%s4 + $0x28] sm:$0xf]
  %v186 = vld [vmem:[%s4 + $0x2c] sm:$0xf]
  %v187 = vld [vmem:[%s4 + $0x30] sm:$0xf]
  %v188 = vld [vmem:[%s4 + $0x34] sm:$0xf]
  %v189 = vld [vmem:[%s4 + $0x38] sm:$0xf]
  %v190 = vld [vmem:[%s4 + $0x3c] sm:$0xf]
  %v191 = vld [vmem:[%s5] sm:$0x1]
  %v193 = vlaneseq
  %v194 = vshrl.u32 %v193, 7
  %v195 = vsub.s32 0, %v194
  %v196 = vrot.slane %v191, %v195
  %v214 = vunpack.c.l.b16 %v175
  %v215 = vunpack.c.l.b16 %v176
  %v216 = vunpack.c.l.b16 %v177
  %v217 = vunpack.c.l.b16 %v178
  %v218 = vunpack.c.l.b16 %v179
  %v219 = vunpack.c.l.b16 %v180
  %v220 = vunpack.c.l.b16 %v181
  %v221 = vunpack.c.l.b16 %v182
  %v222 = vunpack.c.l.b16 %v183
  %v223 = vunpack.c.l.b16 %v184
  %v224 = vunpack.c.l.b16 %v185
  %v225 = vunpack.c.l.b16 %v186
  %v226 = vunpack.c.l.b16 %v187
  %v227 = vunpack.c.l.b16 %v188
  %v228 = vunpack.c.l.b16 %v189
  %v229 = vunpack.c.l.b16 %v190
  %v230 = vpack.c.b16 %v215, %v214
  %v231 = vpack.c.b16 %v217, %v216
  %v232 = vpack.c.b16 %v219, %v218
  %v233 = vpack.c.b16 %v221, %v220
  %v234 = vpack.c.b16 %v223, %v222
  %v235 = vpack.c.b16 %v225, %v224
  %v236 = vpack.c.b16 %v227, %v226
  %v237 = vpack.c.b16 %v229, %v228
  %246 = vmatprep.subr.bf16.mxu0 0
  %247 = vmatpush1.bf16.msra.mxu0 %v230
  %248 = vmatprep.subr.bf16.mxu0 0
  %249 = vmatpush1.bf16.msra.mxu0 %v231
  %250 = vmatprep.subr.bf16.mxu0 0
  %251 = vmatpush1.bf16.msra.mxu0 %v232
  %252 = vmatprep.subr.bf16.mxu0 0
  %253 = vmatpush1.bf16.msra.mxu0 %v233
  %254 = vmatprep.subr.bf16.mxu0 0
  %255 = vmatpush1.bf16.msra.mxu0 %v234
  %256 = vmatprep.subr.bf16.mxu0 0
  %257 = vmatpush1.bf16.msra.mxu0 %v235
  %258 = vmatprep.subr.bf16.mxu0 0
  %259 = vmatpush1.bf16.msra.mxu0 %v236
  %260 = vmatprep.subr.bf16.mxu0 0
  %261 = vmatpush1.bf16.msra.mxu0 %v237
  %262 = vmatprep.subr.bf16.mxu0 0
  %263 = vmatpush1.bf16.msra.mxu0 0
  %264 = vmatprep.subr.bf16.mxu0 0
  %265 = vmatpush1.bf16.msra.mxu0 0
  %266 = vmatprep.subr.bf16.mxu0 0
  %267 = vmatpush1.bf16.msra.mxu0 0
  %268 = vmatprep.subr.bf16.mxu0 0
  %269 = vmatpush1.bf16.msra.mxu0 0
  %270 = vmatprep.subr.bf16.mxu0 0
  %271 = vmatpush1.bf16.msra.mxu0 0
  %272 = vmatprep.subr.bf16.mxu0 0
  %273 = vmatpush1.bf16.msra.mxu0 0
  %274 = vmatprep.subr.bf16.mxu0 0
  %275 = vmatpush1.bf16.msra.mxu0 0
  %276 = vmatprep.subr.bf16.mxu0 0
  %277 = vmatpush1.bf16.msra.mxu0 0
  %278 = vmatprep.mubr.bf16.mxu0 0
  %279 = vmatmul.mubr.bf16.gmra.mrb[0].mxu0 %v174
  %v280 = vpop.f32.mrb[0].mxu0
  %v281 = vadd.f32 %v196, %v280
  %v282 = vpop.f32.mrb[0].mxu0
  %v283 = vpop.f32.mrb[0].mxu0
  %v284 = vadd.f32 %v196, %v283
  %v285 = vpop.f32.mrb[0].mxu0
  %286 = vdwg.mxu0
  %v287 = vmul.f32 %v281, 0.2
  %v288 = vmul.f32 %v284, 0.2
  %v289 = vmax.f32 %v281, %v287
  %v290 = vmax.f32 %v284, %v288
  %v291 = vpack.c.bf16 %v290, %v289
  %v292 = vld [vmem:[%s6] sm:$0xff]
  %v293 = vld [vmem:[%s6 + $0x8] sm:$0xff]
  %v294 = vld [vmem:[%s6 + $0x10] sm:$0xff]
  %v295 = vld [vmem:[%s6 + $0x18] sm:$0xff]
  %v296 = vld [vmem:[%s6 + $0x20] sm:$0xff]
  %v297 = vld [vmem:[%s6 + $0x28] sm:$0xff]
  %v298 = vld [vmem:[%s6 + $0x30] sm:$0xff]
  %v299 = vld [vmem:[%s6 + $0x38] sm:$0xff]
  %v300 = vld [vmem:[%s6 + $0x40] sm:$0xff]
  %v301 = vld [vmem:[%s6 + $0x48] sm:$0xff]
  %v302 = vld [vmem:[%s6 + $0x50] sm:$0xff]
  %v303 = vld [vmem:[%s6 + $0x58] sm:$0xff]
  %v304 = vld [vmem:[%s6 + $0x60] sm:$0xff]
  %v305 = vld [vmem:[%s6 + $0x68] sm:$0xff]
  %v306 = vld [vmem:[%s6 + $0x70] sm:$0xff]
  %v307 = vld [vmem:[%s6 + $0x78] sm:$0xff]
  %v308 = vld [vmem:[%s7] sm:$0x3]
  %v310 = vlaneseq
  %v311 = vshrl.u32 %v310, 7
  %v312 = vsub.s32 0, %v311
  %v313 = vrot.slane %v308, %v312
  %v314 = vlaneseq
  %v315 = vshrl.u32 %v314, 7
  %v316 = vsub.s32 1, %v315
  %v317 = vrot.slane %v308, %v316
  %v336 = vunpack.c.l.b16 %v292
  %v337 = vunpack.c.h.b16 %v292
  %v338 = vunpack.c.l.b16 %v293
  %v339 = vunpack.c.h.b16 %v293
  %v340 = vunpack.c.l.b16 %v294
  %v341 = vunpack.c.h.b16 %v294
  %v342 = vunpack.c.l.b16 %v295
  %v343 = vunpack.c.h.b16 %v295
  %v344 = vunpack.c.l.b16 %v296
  %v345 = vunpack.c.h.b16 %v296
  %v346 = vunpack.c.l.b16 %v297
  %v347 = vunpack.c.h.b16 %v297
  %v348 = vunpack.c.l.b16 %v298
  %v349 = vunpack.c.h.b16 %v298
  %v350 = vunpack.c.l.b16 %v299
  %v351 = vunpack.c.h.b16 %v299
  %v352 = vunpack.c.l.b16 %v300
  %v353 = vunpack.c.h.b16 %v300
  %v354 = vunpack.c.l.b16 %v301
  %v355 = vunpack.c.h.b16 %v301
  %v356 = vunpack.c.l.b16 %v302
  %v357 = vunpack.c.h.b16 %v302
  %v358 = vunpack.c.l.b16 %v303
  %v359 = vunpack.c.h.b16 %v303
  %v360 = vunpack.c.l.b16 %v304
  %v361 = vunpack.c.h.b16 %v304
  %v362 = vunpack.c.l.b16 %v305
  %v363 = vunpack.c.h.b16 %v305
  %v364 = vunpack.c.l.b16 %v306
  %v365 = vunpack.c.h.b16 %v306
  %v366 = vunpack.c.l.b16 %v307
  %v367 = vunpack.c.h.b16 %v307
  %v368 = vpack.c.b16 %v338, %v336
  %v369 = vpack.c.b16 %v339, %v337
  %v370 = vpack.c.b16 %v342, %v340
  %v371 = vpack.c.b16 %v343, %v341
  %v372 = vpack.c.b16 %v346, %v344
  %v373 = vpack.c.b16 %v347, %v345
  %v374 = vpack.c.b16 %v350, %v348
  %v375 = vpack.c.b16 %v351, %v349
  %v376 = vpack.c.b16 %v354, %v352
  %v377 = vpack.c.b16 %v355, %v353
  %v378 = vpack.c.b16 %v358, %v356
  %v379 = vpack.c.b16 %v359, %v357
  %v380 = vpack.c.b16 %v362, %v360
  %v381 = vpack.c.b16 %v363, %v361
  %v382 = vpack.c.b16 %v366, %v364
  %v383 = vpack.c.b16 %v367, %v365
  %400 = vmatprep.subr.bf16.mxu0 %v369
  %401 = vmatpush1.bf16.msra.mxu0 %v368
  %402 = vmatprep.subr.bf16.mxu0 %v371
  %403 = vmatpush1.bf16.msra.mxu0 %v370
  %404 = vmatprep.subr.bf16.mxu0 %v373
  %405 = vmatpush1.bf16.msra.mxu0 %v372
  %406 = vmatprep.subr.bf16.mxu0 %v375
  %407 = vmatpush1.bf16.msra.mxu0 %v374
  %408 = vmatprep.subr.bf16.mxu0 %v377
  %409 = vmatpush1.bf16.msra.mxu0 %v376
  %410 = vmatprep.subr.bf16.mxu0 %v379
  %411 = vmatpush1.bf16.msra.mxu0 %v378
  %412 = vmatprep.subr.bf16.mxu0 %v381
  %413 = vmatpush1.bf16.msra.mxu0 %v380
  %414 = vmatprep.subr.bf16.mxu0 %v383
  %415 = vmatpush1.bf16.msra.mxu0 %v382
  %416 = vmatprep.subr.bf16.mxu0 0
  %417 = vmatpush1.bf16.msra.mxu0 0
  %418 = vmatprep.subr.bf16.mxu0 0
  %419 = vmatpush1.bf16.msra.mxu0 0
  %420 = vmatprep.subr.bf16.mxu0 0
  %421 = vmatpush1.bf16.msra.mxu0 0
  %422 = vmatprep.subr.bf16.mxu0 0
  %423 = vmatpush1.bf16.msra.mxu0 0
  %424 = vmatprep.subr.bf16.mxu0 0
  %425 = vmatpush1.bf16.msra.mxu0 0
  %426 = vmatprep.subr.bf16.mxu0 0
  %427 = vmatpush1.bf16.msra.mxu0 0
  %428 = vmatprep.subr.bf16.mxu0 0
  %429 = vmatpush1.bf16.msra.mxu0 0
  %430 = vmatprep.subr.bf16.mxu0 0
  %431 = vmatpush1.bf16.msra.mxu0 0
  %432 = vmatprep.mubr.bf16.mxu0 0
  %433 = vmatmul.mubr.bf16.gmra.mrb[0].mxu0 %v291
  %v434 = vpop.f32.mrb[0].mxu0
  %v435 = vadd.f32 %v313, %v434
  %v436 = vpop.f32.mrb[0].mxu0
  %v437 = vadd.f32 %v317, %v436
  %v438 = vpop.f32.mrb[0].mxu0
  %v439 = vadd.f32 %v313, %v438
  %v440 = vpop.f32.mrb[0].mxu0
  %v441 = vadd.f32 %v317, %v440
  %442 = vdwg.mxu0
  %v443 = vmul.f32 %v437, 0.5
  %v444 = vmul.f32 %v441, 0.5
  %v445 = vmul.f32 %v443, 1.442695
  %v446 = vpow.pop %v445
  %v447 = vmul.f32 %v444, 1.442695
  %v448 = vpow.pop %v447
  %v449 = vld [vmem:[%s1] sm:$0xf]
  %v450 = vld [vmem:[%s1 + $0x4] sm:$0xf]
  %v451 = vunpack.c.l.bf16 %v449
  %v452 = vunpack.c.l.bf16 %v450
  %v453 = vmul.f32 %v446, %v451
  %v454 = vmul.f32 %v448, %v452
  %v455 = vadd.f32 %v435, %v453
  %v456 = vadd.f32 %v439, %v454
  %v457 = vpack.c.bf16 %v456, %v455
  %v458 = vld [vmem:[%s8] sm:$0xf]
  %v459 = vld [vmem:[%s8 + $0x4] sm:$0xf]
  %v460 = vld [vmem:[%s8 + $0x8] sm:$0xf]
  %v461 = vld [vmem:[%s8 + $0xc] sm:$0xf]
  %v462 = vld [vmem:[%s8 + $0x10] sm:$0xf]
  %v463 = vld [vmem:[%s8 + $0x14] sm:$0xf]
  %v464 = vld [vmem:[%s8 + $0x18] sm:$0xf]
  %v465 = vld [vmem:[%s8 + $0x1c] sm:$0xf]
  %v466 = vld [vmem:[%s8 + $0x20] sm:$0xf]
  %v467 = vld [vmem:[%s8 + $0x24] sm:$0xf]
  %v468 = vld [vmem:[%s8 + $0x28] sm:$0xf]
  %v469 = vld [vmem:[%s8 + $0x2c] sm:$0xf]
  %v470 = vld [vmem:[%s8 + $0x30] sm:$0xf]
  %v471 = vld [vmem:[%s8 + $0x34] sm:$0xf]
  %v472 = vld [vmem:[%s8 + $0x38] sm:$0xf]
  %v473 = vld [vmem:[%s8 + $0x3c] sm:$0xf]
  %v474 = vld [vmem:[%s9] sm:$0x1]
  %v476 = vlaneseq
  %v477 = vshrl.u32 %v476, 7
  %v478 = vsub.s32 0, %v477
  %v479 = vrot.slane %v474, %v478
  %v497 = vunpack.c.l.b16 %v458
  %v498 = vunpack.c.l.b16 %v459
  %v499 = vunpack.c.l.b16 %v460
  %v500 = vunpack.c.l.b16 %v461
  %v501 = vunpack.c.l.b16 %v462
  %v502 = vunpack.c.l.b16 %v463
  %v503 = vunpack.c.l.b16 %v464
  %v504 = vunpack.c.l.b16 %v465
  %v505 = vunpack.c.l.b16 %v466
  %v506 = vunpack.c.l.b16 %v467
  %v507 = vunpack.c.l.b16 %v468
  %v508 = vunpack.c.l.b16 %v469
  %v509 = vunpack.c.l.b16 %v470
  %v510 = vunpack.c.l.b16 %v471
  %v511 = vunpack.c.l.b16 %v472
  %v512 = vunpack.c.l.b16 %v473
  %v513 = vpack.c.b16 %v498, %v497
  %v514 = vpack.c.b16 %v500, %v499
  %v515 = vpack.c.b16 %v502, %v501
  %v516 = vpack.c.b16 %v504, %v503
  %v517 = vpack.c.b16 %v506, %v505
  %v518 = vpack.c.b16 %v508, %v507
  %v519 = vpack.c.b16 %v510, %v509
  %v520 = vpack.c.b16 %v512, %v511
  %529 = vmatprep.subr.bf16.mxu0 0
  %530 = vmatpush1.bf16.msra.mxu0 %v513
  %531 = vmatprep.subr.bf16.mxu0 0
  %532 = vmatpush1.bf16.msra.mxu0 %v514
  %533 = vmatprep.subr.bf16.mxu0 0
  %534 = vmatpush1.bf16.msra.mxu0 %v515
  %535 = vmatprep.subr.bf16.mxu0 0
  %536 = vmatpush1.bf16.msra.mxu0 %v516
  %537 = vmatprep.subr.bf16.mxu0 0
  %538 = vmatpush1.bf16.msra.mxu0 %v517
  %539 = vmatprep.subr.bf16.mxu0 0
  %540 = vmatpush1.bf16.msra.mxu0 %v518
  %541 = vmatprep.subr.bf16.mxu0 0
  %542 = vmatpush1.bf16.msra.mxu0 %v519
  %543 = vmatprep.subr.bf16.mxu0 0
  %544 = vmatpush1.bf16.msra.mxu0 %v520
  %545 = vmatprep.subr.bf16.mxu0 0
  %546 = vmatpush1.bf16.msra.mxu0 0
  %547 = vmatprep.subr.bf16.mxu0 0
  %548 = vmatpush1.bf16.msra.mxu0 0
  %549 = vmatprep.subr.bf16.mxu0 0
  %550 = vmatpush1.bf16.msra.mxu0 0
  %551 = vmatprep.subr.bf16.mxu0 0
  %552 = vmatpush1.bf16.msra.mxu0 0
  %553 = vmatprep.subr.bf16.mxu0 0
  %554 = vmatpush1.bf16.msra.mxu0 0
  %555 = vmatprep.subr.bf16.mxu0 0
  %556 = vmatpush1.bf16.msra.mxu0 0
  %557 = vmatprep.subr.bf16.mxu0 0
  %558 = vmatpush1.bf16.msra.mxu0 0
  %559 = vmatprep.subr.bf16.mxu0 0
  %560 = vmatpush1.bf16.msra.mxu0 0
  %561 = vmatprep.mubr.bf16.mxu0 0
  %562 = vmatmul.mubr.bf16.gmra.mrb[0].mxu0 %v457
  %v563 = vpop.f32.mrb[0].mxu0
  %v564 = vadd.f32 %v479, %v563
  %v565 = vpop.f32.mrb[0].mxu0
  %v566 = vpop.f32.mrb[0].mxu0
  %v567 = vadd.f32 %v479, %v566
  %v568 = vpop.f32.mrb[0].mxu0
  %569 = vdwg.mxu0
  %v570 = vmul.f32 %v564, 0.2
  %v571 = vmul.f32 %v567, 0.2
  %v572 = vmax.f32 %v564, %v570
  %v573 = vmax.f32 %v567, %v571
  %v574 = vpack.c.bf16 %v573, %v572
  %v575 = vld [vmem:[%s10] sm:$0xf]
  %v576 = vld [vmem:[%s10 + $0x4] sm:$0xf]
  %v577 = vld [vmem:[%s10 + $0x8] sm:$0xf]
  %v578 = vld [vmem:[%s10 + $0xc] sm:$0xf]
  %v579 = vld [vmem:[%s10 + $0x10] sm:$0xf]
  %v580 = vld [vmem:[%s10 + $0x14] sm:$0xf]
  %v581 = vld [vmem:[%s10 + $0x18] sm:$0xf]
  %v582 = vld [vmem:[%s10 + $0x1c] sm:$0xf]
  %v583 = vld [vmem:[%s10 + $0x20] sm:$0xf]
  %v584 = vld [vmem:[%s10 + $0x24] sm:$0xf]
  %v585 = vld [vmem:[%s10 + $0x28] sm:$0xf]
  %v586 = vld [vmem:[%s10 + $0x2c] sm:$0xf]
  %v587 = vld [vmem:[%s10 + $0x30] sm:$0xf]
  %v588 = vld [vmem:[%s10 + $0x34] sm:$0xf]
  %v589 = vld [vmem:[%s10 + $0x38] sm:$0xf]
  %v590 = vld [vmem:[%s10 + $0x3c] sm:$0xf]
  %v591 = vld [vmem:[%s11] sm:$0x1]
  %v593 = vlaneseq
  %v594 = vshrl.u32 %v593, 7
  %v595 = vsub.s32 0, %v594
  %v596 = vrot.slane %v591, %v595
  %v614 = vunpack.c.l.b16 %v575
  %v615 = vunpack.c.l.b16 %v576
  %v616 = vunpack.c.l.b16 %v577
  %v617 = vunpack.c.l.b16 %v578
  %v618 = vunpack.c.l.b16 %v579
  %v619 = vunpack.c.l.b16 %v580
  %v620 = vunpack.c.l.b16 %v581
  %v621 = vunpack.c.l.b16 %v582
  %v622 = vunpack.c.l.b16 %v583
  %v623 = vunpack.c.l.b16 %v584
  %v624 = vunpack.c.l.b16 %v585
  %v625 = vunpack.c.l.b16 %v586
  %v626 = vunpack.c.l.b16 %v587
  %v627 = vunpack.c.l.b16 %v588
  %v628 = vunpack.c.l.b16 %v589
  %v629 = vunpack.c.l.b16 %v590
  %v630 = vpack.c.b16 %v615, %v614
  %v631 = vpack.c.b16 %v617, %v616
  %v632 = vpack.c.b16 %v619, %v618
  %v633 = vpack.c.b16 %v621, %v620
  %v634 = vpack.c.b16 %v623, %v622
  %v635 = vpack.c.b16 %v625, %v624
  %v636 = vpack.c.b16 %v627, %v626
  %v637 = vpack.c.b16 %v629, %v628
  %646 = vmatprep.subr.bf16.mxu0 0
  %647 = vmatpush1.bf16.msra.mxu0 %v630
  %648 = vmatprep.subr.bf16.mxu0 0
  %649 = vmatpush1.bf16.msra.mxu0 %v631
  %650 = vmatprep.subr.bf16.mxu0 0
  %651 = vmatpush1.bf16.msra.mxu0 %v632
  %652 = vmatprep.subr.bf16.mxu0 0
  %653 = vmatpush1.bf16.msra.mxu0 %v633
  %654 = vmatprep.subr.bf16.mxu0 0
  %655 = vmatpush1.bf16.msra.mxu0 %v634
  %656 = vmatprep.subr.bf16.mxu0 0
  %657 = vmatpush1.bf16.msra.mxu0 %v635
  %658 = vmatprep.subr.bf16.mxu0 0
  %659 = vmatpush1.bf16.msra.mxu0 %v636
  %660 = vmatprep.subr.bf16.mxu0 0
  %661 = vmatpush1.bf16.msra.mxu0 %v637
  %662 = vmatprep.subr.bf16.mxu0 0
  %663 = vmatpush1.bf16.msra.mxu0 0
  %664 = vmatprep.subr.bf16.mxu0 0
  %665 = vmatpush1.bf16.msra.mxu0 0
  %666 = vmatprep.subr.bf16.mxu0 0
  %667 = vmatpush1.bf16.msra.mxu0 0
  %668 = vmatprep.subr.bf16.mxu0 0
  %669 = vmatpush1.bf16.msra.mxu0 0
  %670 = vmatprep.subr.bf16.mxu0 0
  %671 = vmatpush1.bf16.msra.mxu0 0
  %672 = vmatprep.subr.bf16.mxu0 0
  %673 = vmatpush1.bf16.msra.mxu0 0
  %674 = vmatprep.subr.bf16.mxu0 0
  %675 = vmatpush1.bf16.msra.mxu0 0
  %676 = vmatprep.subr.bf16.mxu0 0
  %677 = vmatpush1.bf16.msra.mxu0 0
  %678 = vmatprep.mubr.bf16.mxu0 0
  %679 = vmatmul.mubr.bf16.gmra.mrb[0].mxu0 %v574
  %v680 = vpop.f32.mrb[0].mxu0
  %v681 = vadd.f32 %v596, %v680
  %v682 = vpop.f32.mrb[0].mxu0
  %v683 = vpop.f32.mrb[0].mxu0
  %v684 = vadd.f32 %v596, %v683
  %v685 = vpop.f32.mrb[0].mxu0
  %686 = vdwg.mxu0
  %v687 = vmul.f32 %v681, 0.2
  %v688 = vmul.f32 %v684, 0.2
  %v689 = vmax.f32 %v681, %v687
  %v690 = vmax.f32 %v684, %v688
  %v691 = vpack.c.bf16 %v690, %v689
  %v692 = vld [vmem:[%s12] sm:$0xf]
  %v693 = vld [vmem:[%s12 + $0x4] sm:$0xf]
  %v694 = vld [vmem:[%s12 + $0x8] sm:$0xf]
  %v695 = vld [vmem:[%s12 + $0xc] sm:$0xf]
  %v696 = vld [vmem:[%s12 + $0x10] sm:$0xf]
  %v697 = vld [vmem:[%s12 + $0x14] sm:$0xf]
  %v698 = vld [vmem:[%s12 + $0x18] sm:$0xf]
  %v699 = vld [vmem:[%s12 + $0x1c] sm:$0xf]
  %v700 = vld [vmem:[%s12 + $0x20] sm:$0xf]
  %v701 = vld [vmem:[%s12 + $0x24] sm:$0xf]
  %v702 = vld [vmem:[%s12 + $0x28] sm:$0xf]
  %v703 = vld [vmem:[%s12 + $0x2c] sm:$0xf]
  %v704 = vld [vmem:[%s12 + $0x30] sm:$0xf]
  %v705 = vld [vmem:[%s12 + $0x34] sm:$0xf]
  %v706 = vld [vmem:[%s12 + $0x38] sm:$0xf]
  %v707 = vld [vmem:[%s12 + $0x3c] sm:$0xf]
  %v708 = vld [vmem:[%s13] sm:$0x1]
  %v710 = vlaneseq
  %v711 = vshrl.u32 %v710, 7
  %v712 = vsub.s32 0, %v711
  %v713 = vrot.slane %v708, %v712
  %v731 = vunpack.c.l.b16 %v692
  %v732 = vunpack.c.l.b16 %v693
  %v733 = vunpack.c.l.b16 %v694
  %v734 = vunpack.c.l.b16 %v695
  %v735 = vunpack.c.l.b16 %v696
  %v736 = vunpack.c.l.b16 %v697
  %v737 = vunpack.c.l.b16 %v698
  %v738 = vunpack.c.l.b16 %v699
  %v739 = vunpack.c.l.b16 %v700
  %v740 = vunpack.c.l.b16 %v701
  %v741 = vunpack.c.l.b16 %v702
  %v742 = vunpack.c.l.b16 %v703
  %v743 = vunpack.c.l.b16 %v704
  %v744 = vunpack.c.l.b16 %v705
  %v745 = vunpack.c.l.b16 %v706
  %v746 = vunpack.c.l.b16 %v707
  %v747 = vpack.c.b16 %v732, %v731
  %v748 = vpack.c.b16 %v734, %v733
  %v749 = vpack.c.b16 %v736, %v735
  %v750 = vpack.c.b16 %v738, %v737
  %v751 = vpack.c.b16 %v740, %v739
  %v752 = vpack.c.b16 %v742, %v741
  %v753 = vpack.c.b16 %v744, %v743
  %v754 = vpack.c.b16 %v746, %v745
  %763 = vmatprep.subr.bf16.mxu0 0
  %764 = vmatpush1.bf16.msra.mxu0 %v747
  %765 = vmatprep.subr.bf16.mxu0 0
  %766 = vmatpush1.bf16.msra.mxu0 %v748
  %767 = vmatprep.subr.bf16.mxu0 0
  %768 = vmatpush1.bf16.msra.mxu0 %v749
  %769 = vmatprep.subr.bf16.mxu0 0
  %770 = vmatpush1.bf16.msra.mxu0 %v750
  %771 = vmatprep.subr.bf16.mxu0 0
  %772 = vmatpush1.bf16.msra.mxu0 %v751
  %773 = vmatprep.subr.bf16.mxu0 0
  %774 = vmatpush1.bf16.msra.mxu0 %v752
  %775 = vmatprep.subr.bf16.mxu0 0
  %776 = vmatpush1.bf16.msra.mxu0 %v753
  %777 = vmatprep.subr.bf16.mxu0 0
  %778 = vmatpush1.bf16.msra.mxu0 %v754
  %779 = vmatprep.subr.bf16.mxu0 0
  %780 = vmatpush1.bf16.msra.mxu0 0
  %781 = vmatprep.subr.bf16.mxu0 0
  %782 = vmatpush1.bf16.msra.mxu0 0
  %783 = vmatprep.subr.bf16.mxu0 0
  %784 = vmatpush1.bf16.msra.mxu0 0
  %785 = vmatprep.subr.bf16.mxu0 0
  %786 = vmatpush1.bf16.msra.mxu0 0
  %787 = vmatprep.subr.bf16.mxu0 0
  %788 = vmatpush1.bf16.msra.mxu0 0
  %789 = vmatprep.subr.bf16.mxu0 0
  %790 = vmatpush1.bf16.msra.mxu0 0
  %791 = vmatprep.subr.bf16.mxu0 0
  %792 = vmatpush1.bf16.msra.mxu0 0
  %793 = vmatprep.subr.bf16.mxu0 0
  %794 = vmatpush1.bf16.msra.mxu0 0
  %795 = vmatprep.mubr.bf16.mxu0 0
  %796 = vmatmul.mubr.bf16.gmra.mrb[0].mxu0 %v691
  %v797 = vpop.f32.mrb[0].mxu0
  %v798 = vadd.f32 %v713, %v797
  %v799 = vpop.f32.mrb[0].mxu0
  %v800 = vpop.f32.mrb[0].mxu0
  %v801 = vadd.f32 %v713, %v800
  %v802 = vpop.f32.mrb[0].mxu0
  %803 = vdwg.mxu0
  %v804 = vpack.c.bf16 %v801, %v798
  %v806 = vunpack.c.l.b16 %v804
  %v807 = vunpack.c.h.b16 %v804
  %v808 = vpack.c.b16 %v806, %v806
  %v809 = vpack.c.b16 %v807, %v807
  %812 = vst [vmem:[%s14] sm:$0xf] %v808
  %813 = vst [vmem:[%s14 + $0x4] sm:$0xf] %v809
  %v814 = vpack.c.bf16 %v439, %v435
  %v815 = vpack.c.bf16 %v441, %v437
  %v818 = vunpack.c.l.b16 %v814
  %v819 = vunpack.c.l.b16 %v815
  %v820 = vunpack.c.h.b16 %v814
  %v821 = vunpack.c.h.b16 %v815
  %v822 = vpack.c.b16 %v819, %v818
  %v823 = vpack.c.b16 %v821, %v820
  %826 = vst [vmem:[%s15] sm:$0xff] %v822
  %827 = vst [vmem:[%s15 + $0x8] sm:$0xff] %v823
  // Predicated region
  $region58: #{vae_forward.1} parent=0 // pred_check
    _
  $region59: #{vae_forward.1} parent=0 // pred_check_branch
    %829 = sbr.rel (0) target = $region61
  $region60: #{vae_forward.1} parent=0 // pred_region
    _
  $region61: #{vae_forward.1} parent=0 // pred_fallthru
    _
  // Predicated region
  $region62: #{vae_forward.1} parent=0 // pred_check
    _
  $region63: #{vae_forward.1} parent=0 // pred_check_branch
    %831 = sbr.rel (0) target = $region65
  $region64: #{vae_forward.1} parent=0 // pred_region
    _
  $region65: #{vae_forward.1} parent=0 // pred_fallthru
    _
  // Predicated region
  $region66: #{vae_forward.1} parent=0 // pred_check
    _
  $region67: #{vae_forward.1} parent=0 // pred_check_branch
    %833 = sbr.rel (0) target = $region69
  $region68: #{vae_forward.1} parent=0 // pred_region
    _
  $region69: #{vae_forward.1} parent=0 // pred_fallthru
    _
  // Predicated region
  $region70: #{vae_forward.1} parent=0 // pred_check
    _
  $region71: #{vae_forward.1} parent=0 // pred_check_branch
    %835 = sbr.rel (0) target = $region73
  $region72: #{vae_forward.1} parent=0 // pred_region
    _
  $region73: #{vae_forward.1} parent=0 // pred_fallthru
    _

</llo_original>
